<compile_context>
chip_gen: v5e
topology: v5e:2x2
jax: 0.10.0
libtpu: 0.0.40
codegen_flags: <defaults>
</compile_context>

<pallas_src>
import functools

import jax
import jax.numpy as jnp
from jax.experimental import pallas as pl
from jax.experimental.pallas import tpu as pltpu

INPUT_SIZE = 13
NUM_CONDITIONS = 3
OUTPUT_SIZE = 5
H1, H2, H3 = 128, 64, 32


def _round_up(n, m):
    return (n + m - 1) // m * m


def _device_kind():
    try:
        return jax.devices()[0].device_kind.lower()
    except Exception:
        return ""


def _sigmoid(v):
    # tanh-form sigmoid: one EUP push (tanh) + two cheap VPU ops, instead of
    # exp + reciprocal (two EUP pushes). Numerically identical to sigmoid.
    return 0.5 * (1.0 + jnp.tanh(0.5 * v))


def _silu(v):
    return v * _sigmoid(v)


def _cbn_bpnn_kernel(x_ref, cond_ref, w1_ref, b1_ref, w2_ref, b2_ref,
                     w3_ref, b3_ref, w4_ref, b4_ref, wc_ref, bc_ref,
                     out_ref, *, act_dtype):
    # Backbone: Linear(13,128)->SiLU->Linear(128,64)->SiLU->Linear(64,32)
    #           ->SiLU->Linear(32,5). Dropout(0.2) is identity in eval mode.
    x = x_ref[...].astype(jnp.bfloat16)                              # (TB,13)

    z1 = jnp.dot(x, w1_ref[...],
                 preferred_element_type=jnp.float32) + b1_ref[...]   # (TB,128) f32
    h1 = _silu(z1.astype(act_dtype)).astype(jnp.bfloat16)

    z2 = jnp.dot(h1, w2_ref[...],
                 preferred_element_type=jnp.float32) + b2_ref[...]   # (TB,64) f32
    h2 = _silu(z2.astype(act_dtype)).astype(jnp.bfloat16)

    z3 = jnp.dot(h2, w3_ref[...],
                 preferred_element_type=jnp.float32) + b3_ref[...]   # (TB,32) f32
    h3 = _silu(z3.astype(act_dtype)).astype(jnp.bfloat16)

    main = jnp.dot(h3, w4_ref[...],
                   preferred_element_type=jnp.float32) + b4_ref[...]  # (TB,5) f32

    # Condition gate (3 -> 5): tiny, so keep it entirely on the VPU as three
    # broadcast multiply-accumulates in f32 (no extra MXU pass, no 133-wide
    # fused layer-1).
    c = cond_ref[...].astype(jnp.float32)                            # (TB,3)
    cw = wc_ref[...]                                                 # (3,5)  f32
    logits = (bc_ref[...]
              + c[:, 0:1] * cw[0:1, :]
              + c[:, 1:2] * cw[1:2, :]
              + c[:, 2:3] * cw[2:3, :])                              # (TB,5) f32
    gate = _sigmoid(logits)

    out_ref[...] = (main * (1.0 + gate)).astype(out_ref.dtype)


def condition_weighted_bpnn(x, cond, params, *, block_batch=None):
    """x: (B, 13), cond: (B, 3) -> (B, 5) f32."""
    B = x.shape[0]

    kind = _device_kind()
    is_v7 = "v7" in kind
    # v5e / older VPU+EUP have no bf16 path -> keep elementwise math in f32.
    old_gen = any(t in kind for t in ("v2", "v3", "v4", "v5"))
    act_dtype = jnp.float32 if old_gen else jnp.bfloat16

    if block_batch is None:
        # Kernel is EUP/VPU-bound with ~0.35 us/grid-step overhead: large
        # batch tiles amortize it. v7x has only 64 MiB physical VMEM.
        block_batch = 4096 if is_v7 else 8192

    TB = _round_up(min(block_batch, _round_up(B, 8)), 8)   # multiple of 8
    Bp = _round_up(B, TB)
    grid_steps = Bp // TB

    xf = x.astype(jnp.float32)
    cf = cond.astype(jnp.float32)
    if Bp != B:
        xf = jnp.pad(xf, ((0, Bp - B), (0, 0)))
        cf = jnp.pad(cf, ((0, Bp - B), (0, 0)))

    weights = (
        params["w1"].astype(jnp.bfloat16), params["b1"],
        params["w2"].astype(jnp.bfloat16), params["b2"],
        params["w3"].astype(jnp.bfloat16), params["b3"],
        params["w4"].astype(jnp.bfloat16), params["b4"],
        params["wc"].astype(jnp.float32), params["bc"].astype(jnp.float32),
    )
    # Constant-index full-shape blocks: weights stay VMEM-resident and are not
    # re-DMA'd per grid step.
    weight_specs = [pl.BlockSpec(w.shape, lambda i: (0, 0)) for w in weights]

    # Batch axis is embarrassingly parallel. CORE_PARALLEL shards the grid
    # across v7x's two TensorCores; PARALLEL elsewhere (single-TC chips).
    core_parallel = getattr(pltpu, "CORE_PARALLEL", None)
    if is_v7 and core_parallel is not None and grid_steps >= 2:
        semantics = (core_parallel,)
    else:
        semantics = (pltpu.PARALLEL,)

    vmem_limit = (56 if is_v7 else 100) * 1024 * 1024

    out = pl.pallas_call(
        functools.partial(_cbn_bpnn_kernel, act_dtype=act_dtype),
        out_shape=jax.ShapeDtypeStruct((Bp, OUTPUT_SIZE), jnp.float32),
        grid=(grid_steps,),
        in_specs=[
            pl.BlockSpec((TB, INPUT_SIZE), lambda i: (i, 0)),
            pl.BlockSpec((TB, NUM_CONDITIONS), lambda i: (i, 0)),
        ] + weight_specs,
        out_specs=pl.BlockSpec((TB, OUTPUT_SIZE), lambda i: (i, 0)),
        compiler_params=pltpu.CompilerParams(
            dimension_semantics=semantics,
            vmem_limit_bytes=vmem_limit),
    )(xf, cf, *weights)
    return out[:B]


def init_params(key):
    """PyTorch-Linear-style init (uniform +/- 1/sqrt(fan_in)); weights stored
    as (in_features, out_features) so the kernel computes y = x @ W + b."""
    def linear(k, fan_in, fan_out):
        kw, kb = jax.random.split(k)
        bound = 1.0 / jnp.sqrt(fan_in)
        w = jax.random.uniform(kw, (fan_in, fan_out), jnp.float32, -bound, bound)
        b = jax.random.uniform(kb, (1, fan_out), jnp.float32, -bound, bound)
        return w, b

    keys = jax.random.split(key, 5)
    w1, b1 = linear(keys[0], INPUT_SIZE, H1)
    w2, b2 = linear(keys[1], H1, H2)
    w3, b3 = linear(keys[2], H2, H3)
    w4, b4 = linear(keys[3], H3, OUTPUT_SIZE)
    wc, bc = linear(keys[4], NUM_CONDITIONS, OUTPUT_SIZE)
    return dict(w1=w1, b1=b1, w2=w2, b2=b2, w3=w3, b3=b3,
                w4=w4, b4=b4, wc=wc, bc=bc)


def _reference(x, cond, p):
    """Pure-JAX fp32 reference (eval-mode dropout = identity)."""
    def silu(v):
        return v * jax.nn.sigmoid(v)
    h = silu(x @ p["w1"] + p["b1"])
    h = silu(h @ p["w2"] + p["b2"])
    h = silu(h @ p["w3"] + p["b3"])
    main = h @ p["w4"] + p["b4"]
    gate = jax.nn.sigmoid(cond @ p["wc"] + p["bc"])
    return main * (1.0 + gate)


if __name__ == "__main__":
    key = jax.random.PRNGKey(0)
    k_x, k_c, k_p = jax.random.split(key, 3)
    params = init_params(k_p)

    # Small primary test (single grid step).
    B = 8
    x = jax.random.normal(k_x, (B, INPUT_SIZE), jnp.float32)
    cond = jax.random.normal(k_c, (B, NUM_CONDITIONS), jnp.float32)
    out = jax.block_until_ready(condition_weighted_bpnn(x, cond, params))
    ref = jax.block_until_ready(_reference(x, cond, params))
    assert out.shape == (B, OUTPUT_SIZE)
    # bf16 matmul operands (+ bf16 activations on v6e/v7x) with f32 accumulate:
    # error for this small MLP is well under 5e-2.
    assert jnp.allclose(out, ref, atol=5e-2, rtol=5e-2), float(
        jnp.max(jnp.abs(out - ref)))

    # Multi-step grid + batch-padding test (B=50, TB=16 -> grid of 4, pad to 64).
    B2 = 50
    x2 = jax.random.normal(jax.random.PRNGKey(1), (B2, INPUT_SIZE), jnp.float32)
    c2 = jax.random.normal(jax.random.PRNGKey(2), (B2, NUM_CONDITIONS), jnp.float32)
    out2 = jax.block_until_ready(
        condition_weighted_bpnn(x2, c2, params, block_batch=16))
    ref2 = jax.block_until_ready(_reference(x2, c2, params))
    assert out2.shape == (B2, OUTPUT_SIZE)
    assert jnp.allclose(out2, ref2, atol=5e-2, rtol=5e-2), float(
        jnp.max(jnp.abs(out2 - ref2)))

    print("KERNEL_OK")
</pallas_src>

<mosaic_0001>
module attributes {stable_mosaic.version = 11 : i64} {
  func.func @_cbn_bpnn_kernel(%arg0: i32, %arg1: memref<8x13xf32, #tpu.memory_space<vmem>>, %arg2: memref<8x3xf32, #tpu.memory_space<vmem>>, %arg3: memref<13x128xbf16, #tpu.memory_space<vmem>>, %arg4: memref<1x128xf32, #tpu.memory_space<vmem>>, %arg5: memref<128x64xbf16, #tpu.memory_space<vmem>>, %arg6: memref<1x64xf32, #tpu.memory_space<vmem>>, %arg7: memref<64x32xbf16, #tpu.memory_space<vmem>>, %arg8: memref<1x32xf32, #tpu.memory_space<vmem>>, %arg9: memref<32x5xbf16, #tpu.memory_space<vmem>>, %arg10: memref<1x5xf32, #tpu.memory_space<vmem>>, %arg11: memref<3x5xf32, #tpu.memory_space<vmem>>, %arg12: memref<1x5xf32, #tpu.memory_space<vmem>>, %arg13: memref<8x5xf32, #tpu.memory_space<vmem>>) attributes {dimension_semantics = [#tpu.dimension_semantics<parallel>], iteration_bounds = array<i64: 1>, scalar_prefetch = 0 : i64, scratch_operands = 0 : i64, tpu.core_type = #tpu.core_type<tc>, window_params = [{transform_indices = @transform_0, window_bounds = array<i64: 8, 13>}, {transform_indices = @transform_1, window_bounds = array<i64: 8, 3>}, {pipeline_mode = #tpu.pipeline_mode<synchronous>, transform_indices = @transform_2, window_bounds = array<i64: 13, 128>}, {pipeline_mode = #tpu.pipeline_mode<synchronous>, transform_indices = @transform_3, window_bounds = array<i64: 1, 128>}, {pipeline_mode = #tpu.pipeline_mode<synchronous>, transform_indices = @transform_4, window_bounds = array<i64: 128, 64>}, {pipeline_mode = #tpu.pipeline_mode<synchronous>, transform_indices = @transform_5, window_bounds = array<i64: 1, 64>}, {pipeline_mode = #tpu.pipeline_mode<synchronous>, transform_indices = @transform_6, window_bounds = array<i64: 64, 32>}, {pipeline_mode = #tpu.pipeline_mode<synchronous>, transform_indices = @transform_7, window_bounds = array<i64: 1, 32>}, {pipeline_mode = #tpu.pipeline_mode<synchronous>, transform_indices = @transform_8, window_bounds = array<i64: 32, 5>}, {pipeline_mode = #tpu.pipeline_mode<synchronous>, transform_indices = @transform_9, window_bounds = array<i64: 1, 5>}, {pipeline_mode = #tpu.pipeline_mode<synchronous>, transform_indices = @transform_10, window_bounds = array<i64: 3, 5>}, {pipeline_mode = #tpu.pipeline_mode<synchronous>, transform_indices = @transform_11, window_bounds = array<i64: 1, 5>}, {transform_indices = @transform_12, window_bounds = array<i64: 8, 5>}]} {
    %c0 = arith.constant 0 : index
    %c0_0 = arith.constant 0 : index
    %0 = vector.load %arg1[%c0, %c0_0] : memref<8x13xf32, #tpu.memory_space<vmem>>, vector<8x13xf32>
    %1 = arith.truncf %0 : vector<8x13xf32> to vector<8x13xbf16>
    %c0_1 = arith.constant 0 : index
    %c0_2 = arith.constant 0 : index
    %2 = vector.load %arg3[%c0_1, %c0_2] : memref<13x128xbf16, #tpu.memory_space<vmem>>, vector<13x128xbf16>
    %cst = arith.constant dense<0.000000e+00> : vector<8x128xf32>
    %3 = tpu.matmul %1, %2, %cst {dimension_numbers = #tpu.dot_dimension_numbers<[1], [0], [0], [1], [0, 0, 1, 1], [], []>} : vector<8x13xbf16>, vector<13x128xbf16>, vector<8x128xf32> -> vector<8x128xf32>
    %c0_3 = arith.constant 0 : index
    %c0_4 = arith.constant 0 : index
    %4 = vector.load %arg4[%c0_3, %c0_4] : memref<1x128xf32, #tpu.memory_space<vmem>>, vector<1x128xf32>
    %5 = vector.broadcast %4 : vector<1x128xf32> to vector<8x128xf32>
    %6 = arith.addf %3, %5 : vector<8x128xf32>
    %7 = arith.truncf %6 : vector<8x128xf32> to vector<8x128xbf16>
    %cst_5 = arith.constant 5.000000e-01 : bf16
    %8 = vector.broadcast %cst_5 : bf16 to vector<8x128xbf16>
    %9 = arith.mulf %8, %7 : vector<8x128xbf16>
    %10 = math.tanh %9 : vector<8x128xbf16>
    %cst_6 = arith.constant 1.000000e+00 : bf16
    %11 = vector.broadcast %cst_6 : bf16 to vector<8x128xbf16>
    %12 = arith.addf %11, %10 : vector<8x128xbf16>
    %cst_7 = arith.constant 5.000000e-01 : bf16
    %13 = vector.broadcast %cst_7 : bf16 to vector<8x128xbf16>
    %14 = arith.mulf %13, %12 : vector<8x128xbf16>
    %15 = arith.mulf %7, %14 : vector<8x128xbf16>
    %c0_8 = arith.constant 0 : index
    %c0_9 = arith.constant 0 : index
    %16 = vector.load %arg5[%c0_8, %c0_9] : memref<128x64xbf16, #tpu.memory_space<vmem>>, vector<128x64xbf16>
    %cst_10 = arith.constant dense<0.000000e+00> : vector<8x64xf32>
    %17 = tpu.matmul %15, %16, %cst_10 {dimension_numbers = #tpu.dot_dimension_numbers<[1], [0], [0], [1], [0, 0, 1, 1], [], []>} : vector<8x128xbf16>, vector<128x64xbf16>, vector<8x64xf32> -> vector<8x64xf32>
    %c0_11 = arith.constant 0 : index
    %c0_12 = arith.constant 0 : index
    %18 = vector.load %arg6[%c0_11, %c0_12] : memref<1x64xf32, #tpu.memory_space<vmem>>, vector<1x64xf32>
    %19 = vector.broadcast %18 : vector<1x64xf32> to vector<8x64xf32>
    %20 = arith.addf %17, %19 : vector<8x64xf32>
    %21 = arith.truncf %20 : vector<8x64xf32> to vector<8x64xbf16>
    %cst_13 = arith.constant 5.000000e-01 : bf16
    %22 = vector.broadcast %cst_13 : bf16 to vector<8x64xbf16>
    %23 = arith.mulf %22, %21 : vector<8x64xbf16>
    %24 = math.tanh %23 : vector<8x64xbf16>
    %cst_14 = arith.constant 1.000000e+00 : bf16
    %25 = vector.broadcast %cst_14 : bf16 to vector<8x64xbf16>
    %26 = arith.addf %25, %24 : vector<8x64xbf16>
    %cst_15 = arith.constant 5.000000e-01 : bf16
    %27 = vector.broadcast %cst_15 : bf16 to vector<8x64xbf16>
    %28 = arith.mulf %27, %26 : vector<8x64xbf16>
    %29 = arith.mulf %21, %28 : vector<8x64xbf16>
    %c0_16 = arith.constant 0 : index
    %c0_17 = arith.constant 0 : index
    %30 = vector.load %arg7[%c0_16, %c0_17] : memref<64x32xbf16, #tpu.memory_space<vmem>>, vector<64x32xbf16>
    %cst_18 = arith.constant dense<0.000000e+00> : vector<8x32xf32>
    %31 = tpu.matmul %29, %30, %cst_18 {dimension_numbers = #tpu.dot_dimension_numbers<[1], [0], [0], [1], [0, 0, 1, 1], [], []>} : vector<8x64xbf16>, vector<64x32xbf16>, vector<8x32xf32> -> vector<8x32xf32>
    %c0_19 = arith.constant 0 : index
    %c0_20 = arith.constant 0 : index
    %32 = vector.load %arg8[%c0_19, %c0_20] : memref<1x32xf32, #tpu.memory_space<vmem>>, vector<1x32xf32>
    %33 = vector.broadcast %32 : vector<1x32xf32> to vector<8x32xf32>
    %34 = arith.addf %31, %33 : vector<8x32xf32>
    %35 = arith.truncf %34 : vector<8x32xf32> to vector<8x32xbf16>
    %cst_21 = arith.constant 5.000000e-01 : bf16
    %36 = vector.broadcast %cst_21 : bf16 to vector<8x32xbf16>
    %37 = arith.mulf %36, %35 : vector<8x32xbf16>
    %38 = math.tanh %37 : vector<8x32xbf16>
    %cst_22 = arith.constant 1.000000e+00 : bf16
    %39 = vector.broadcast %cst_22 : bf16 to vector<8x32xbf16>
    %40 = arith.addf %39, %38 : vector<8x32xbf16>
    %cst_23 = arith.constant 5.000000e-01 : bf16
    %41 = vector.broadcast %cst_23 : bf16 to vector<8x32xbf16>
    %42 = arith.mulf %41, %40 : vector<8x32xbf16>
    %43 = arith.mulf %35, %42 : vector<8x32xbf16>
    %c0_24 = arith.constant 0 : index
    %c0_25 = arith.constant 0 : index
    %44 = vector.load %arg9[%c0_24, %c0_25] : memref<32x5xbf16, #tpu.memory_space<vmem>>, vector<32x5xbf16>
    %cst_26 = arith.constant dense<0.000000e+00> : vector<8x5xf32>
    %45 = tpu.matmul %43, %44, %cst_26 {dimension_numbers = #tpu.dot_dimension_numbers<[1], [0], [0], [1], [0, 0, 1, 1], [], []>} : vector<8x32xbf16>, vector<32x5xbf16>, vector<8x5xf32> -> vector<8x5xf32>
    %c0_27 = arith.constant 0 : index
    %c0_28 = arith.constant 0 : index
    %46 = vector.load %arg10[%c0_27, %c0_28] : memref<1x5xf32, #tpu.memory_space<vmem>>, vector<1x5xf32>
    %47 = vector.broadcast %46 : vector<1x5xf32> to vector<8x5xf32>
    %48 = arith.addf %45, %47 : vector<8x5xf32>
    %c0_29 = arith.constant 0 : index
    %c0_30 = arith.constant 0 : index
    %49 = vector.load %arg2[%c0_29, %c0_30] : memref<8x3xf32, #tpu.memory_space<vmem>>, vector<8x3xf32>
    %c0_31 = arith.constant 0 : index
    %c0_32 = arith.constant 0 : index
    %50 = vector.load %arg11[%c0_31, %c0_32] : memref<3x5xf32, #tpu.memory_space<vmem>>, vector<3x5xf32>
    %c0_33 = arith.constant 0 : index
    %c0_34 = arith.constant 0 : index
    %51 = vector.load %arg12[%c0_33, %c0_34] : memref<1x5xf32, #tpu.memory_space<vmem>>, vector<1x5xf32>
    %52 = vector.extract_strided_slice %49 {offsets = [0, 0], sizes = [8, 1], strides = [1, 1]} : vector<8x3xf32> to vector<8x1xf32>
    %53 = vector.extract_strided_slice %50 {offsets = [0, 0], sizes = [1, 5], strides = [1, 1]} : vector<3x5xf32> to vector<1x5xf32>
    %54 = vector.broadcast %52 : vector<8x1xf32> to vector<8x5xf32>
    %55 = vector.broadcast %53 : vector<1x5xf32> to vector<8x5xf32>
    %56 = arith.mulf %54, %55 : vector<8x5xf32>
    %57 = vector.broadcast %51 : vector<1x5xf32> to vector<8x5xf32>
    %58 = arith.addf %57, %56 : vector<8x5xf32>
    %59 = vector.extract_strided_slice %49 {offsets = [0, 1], sizes = [8, 1], strides = [1, 1]} : vector<8x3xf32> to vector<8x1xf32>
    %60 = vector.extract_strided_slice %50 {offsets = [1, 0], sizes = [1, 5], strides = [1, 1]} : vector<3x5xf32> to vector<1x5xf32>
    %61 = vector.broadcast %59 : vector<8x1xf32> to vector<8x5xf32>
    %62 = vector.broadcast %60 : vector<1x5xf32> to vector<8x5xf32>
    %63 = arith.mulf %61, %62 : vector<8x5xf32>
    %64 = arith.addf %58, %63 : vector<8x5xf32>
    %65 = vector.extract_strided_slice %49 {offsets = [0, 2], sizes = [8, 1], strides = [1, 1]} : vector<8x3xf32> to vector<8x1xf32>
    %66 = vector.extract_strided_slice %50 {offsets = [2, 0], sizes = [1, 5], strides = [1, 1]} : vector<3x5xf32> to vector<1x5xf32>
    %67 = vector.broadcast %65 : vector<8x1xf32> to vector<8x5xf32>
    %68 = vector.broadcast %66 : vector<1x5xf32> to vector<8x5xf32>
    %69 = arith.mulf %67, %68 : vector<8x5xf32>
    %70 = arith.addf %64, %69 : vector<8x5xf32>
    %cst_35 = arith.constant 5.000000e-01 : f32
    %71 = vector.broadcast %cst_35 : f32 to vector<8x5xf32>
    %72 = arith.mulf %71, %70 : vector<8x5xf32>
    %73 = math.tanh %72 : vector<8x5xf32>
    %cst_36 = arith.constant 1.000000e+00 : f32
    %74 = vector.broadcast %cst_36 : f32 to vector<8x5xf32>
    %75 = arith.addf %74, %73 : vector<8x5xf32>
    %cst_37 = arith.constant 5.000000e-01 : f32
    %76 = vector.broadcast %cst_37 : f32 to vector<8x5xf32>
    %77 = arith.mulf %76, %75 : vector<8x5xf32>
    %cst_38 = arith.constant 1.000000e+00 : f32
    %78 = vector.broadcast %cst_38 : f32 to vector<8x5xf32>
    %79 = arith.addf %78, %77 : vector<8x5xf32>
    %80 = arith.mulf %48, %79 : vector<8x5xf32>
    %c0_39 = arith.constant 0 : index
    %c0_40 = arith.constant 0 : index
    %81 = vector.load %arg13[%c0_39, %c0_40] : memref<8x5xf32, #tpu.memory_space<vmem>>, vector<8x5xf32>
    tpu.vector_store %arg13[%c0_39, %c0_40], %80 {strides = array<i32>} : memref<8x5xf32, #tpu.memory_space<vmem>>, vector<8x5xf32>,
    return
  }
  func.func @transform_0(%arg0: i32) -> (i32, i32) {
    %c0_i32 = arith.constant 0 : i32
    %c0_i32_0 = arith.constant 0 : i32
    return %arg0, %c0_i32 : i32, i32
  }
  func.func @transform_1(%arg0: i32) -> (i32, i32) {
    %c0_i32 = arith.constant 0 : i32
    %c0_i32_0 = arith.constant 0 : i32
    return %arg0, %c0_i32 : i32, i32
  }
  func.func @transform_2(%arg0: i32) -> (i32, i32) {
    %c0_i32 = arith.constant 0 : i32
    %c0_i32_0 = arith.constant 0 : i32
    %c0_i32_1 = arith.constant 0 : i32
    return %c0_i32, %c0_i32_0 : i32, i32
  }
  func.func @transform_3(%arg0: i32) -> (i32, i32) {
    %c0_i32 = arith.constant 0 : i32
    %c0_i32_0 = arith.constant 0 : i32
    %c0_i32_1 = arith.constant 0 : i32
    return %c0_i32, %c0_i32_0 : i32, i32
  }
  func.func @transform_4(%arg0: i32) -> (i32, i32) {
    %c0_i32 = arith.constant 0 : i32
    %c0_i32_0 = arith.constant 0 : i32
    %c0_i32_1 = arith.constant 0 : i32
    return %c0_i32, %c0_i32_0 : i32, i32
  }
  func.func @transform_5(%arg0: i32) -> (i32, i32) {
    %c0_i32 = arith.constant 0 : i32
    %c0_i32_0 = arith.constant 0 : i32
    %c0_i32_1 = arith.constant 0 : i32
    return %c0_i32, %c0_i32_0 : i32, i32
  }
  func.func @transform_6(%arg0: i32) -> (i32, i32) {
    %c0_i32 = arith.constant 0 : i32
    %c0_i32_0 = arith.constant 0 : i32
    %c0_i32_1 = arith.constant 0 : i32
    return %c0_i32, %c0_i32_0 : i32, i32
  }
  func.func @transform_7(%arg0: i32) -> (i32, i32) {
    %c0_i32 = arith.constant 0 : i32
    %c0_i32_0 = arith.constant 0 : i32
    %c0_i32_1 = arith.constant 0 : i32
    return %c0_i32, %c0_i32_0 : i32, i32
  }
  func.func @transform_8(%arg0: i32) -> (i32, i32) {
    %c0_i32 = arith.constant 0 : i32
    %c0_i32_0 = arith.constant 0 : i32
    %c0_i32_1 = arith.constant 0 : i32
    return %c0_i32, %c0_i32_0 : i32, i32
  }
  func.func @transform_9(%arg0: i32) -> (i32, i32) {
    %c0_i32 = arith.constant 0 : i32
    %c0_i32_0 = arith.constant 0 : i32
    %c0_i32_1 = arith.constant 0 : i32
    return %c0_i32, %c0_i32_0 : i32, i32
  }
  func.func @transform_10(%arg0: i32) -> (i32, i32) {
    %c0_i32 = arith.constant 0 : i32
    %c0_i32_0 = arith.constant 0 : i32
    %c0_i32_1 = arith.constant 0 : i32
    return %c0_i32, %c0_i32_0 : i32, i32
  }
  func.func @transform_11(%arg0: i32) -> (i32, i32) {
    %c0_i32 = arith.constant 0 : i32
    %c0_i32_0 = arith.constant 0 : i32
    %c0_i32_1 = arith.constant 0 : i32
    return %c0_i32, %c0_i32_0 : i32, i32
  }
  func.func @transform_12(%arg0: i32) -> (i32, i32) {
    %c0_i32 = arith.constant 0 : i32
    %c0_i32_0 = arith.constant 0 : i32
    return %arg0, %c0_i32 : i32, i32
  }
}

</mosaic_0001>

<llo_original>
// kernel: tpu_custom_call.1
$region0: #{tpu_custom_call.1}
  #allocation0 [shape = 'u32[]', space=smem, size = 0x4, offset = 0x4, fixed_abs, tag = 'smem constant byte address 0x4 - core index']
  #allocation1 [shape = 'u32[72,128]{1,0:T(1,128)}', space=vmem, size = 0x9000, scoped, tag = 'internal scratch']
  %s0 = inlined_call_operand.vmem [shape: f32[8,13], index: 0, kind: input, shape index: {}]
  %s1 = inlined_call_operand.vmem [shape: f32[8,3], index: 1, kind: input, shape index: {}]
  %s2 = inlined_call_operand.vmem [shape: bf16[13,128], index: 2, kind: input, shape index: {}]
  %s3 = inlined_call_operand.vmem [shape: f32[1,128], index: 3, kind: input, shape index: {}]
  %s4 = inlined_call_operand.vmem [shape: bf16[128,64], index: 4, kind: input, shape index: {}]
  %s5 = inlined_call_operand.vmem [shape: f32[1,64], index: 5, kind: input, shape index: {}]
  %s6 = inlined_call_operand.vmem [shape: bf16[64,32], index: 6, kind: input, shape index: {}]
  %s7 = inlined_call_operand.vmem [shape: f32[1,32], index: 7, kind: input, shape index: {}]
  %s8 = inlined_call_operand.vmem [shape: bf16[32,5], index: 8, kind: input, shape index: {}]
  %s9 = inlined_call_operand.vmem [shape: f32[1,5], index: 9, kind: input, shape index: {}]
  %s10 = inlined_call_operand.vmem [shape: f32[3,5], index: 10, kind: input, shape index: {}]
  %s11 = inlined_call_operand.vmem [shape: f32[1,5], index: 11, kind: input, shape index: {}]
  %s12 = inlined_call_operand.hbm [shape: f32[8,5], index: 12, kind: output, shape index: {}]
  %s13 = sld [smem:[#allocation0]]
  $region58: #{tpu_custom_call.1} parent=0
    _
  %s15 = ssub.s32 1, %s13
  %s16 = scalar_select 0, %s15, %s13
  $region1: #{tpu_custom_call.1} parent=0
    #allocation2 [shape = 'u8[4096]{0}', space=vmem, size = 0x1000, scoped, tag = 'output window, operand 0, single buffered']
    #allocation3 [shape = 's32[1]{0}', space=sflag, size = 0x4, scoped, tag = 'scoped memory for tpu_custom_call.1']
    %17 = vsyncpa [#allocation3], 0
    // Predicated region
    $region2: #{tpu_custom_call.1} parent=1 // pred_check
      _
    $region3: #{tpu_custom_call.1} parent=1 // pred_check_branch
      %19 = sbr.rel (0) target = $region5
    $region4: #{tpu_custom_call.1} parent=1 // pred_region
      _
    $region5: #{tpu_custom_call.1} parent=1 // pred_fallthru
      _
    // Predicated region
    $region6: #{tpu_custom_call.1} parent=1 // pred_check
      _
    $region7: #{tpu_custom_call.1} parent=1 // pred_check_branch
      %21 = sbr.rel (0) target = $region9
    $region8: #{tpu_custom_call.1} parent=1 // pred_region
      _
    $region9: #{tpu_custom_call.1} parent=1 // pred_fallthru
      _
    // Predicated region
    $region10: #{tpu_custom_call.1} parent=1 // pred_check
      _
    $region11: #{tpu_custom_call.1} parent=1 // pred_check_branch
      %23 = sbr.rel (0) target = $region13
    $region12: #{tpu_custom_call.1} parent=1 // pred_region
      _
    $region13: #{tpu_custom_call.1} parent=1 // pred_fallthru
      _
    // Predicated region
    $region14: #{tpu_custom_call.1} parent=1 // pred_check
      _
    $region15: #{tpu_custom_call.1} parent=1 // pred_check_branch
      %25 = sbr.rel (0) target = $region17
    $region16: #{tpu_custom_call.1} parent=1 // pred_region
      _
    $region17: #{tpu_custom_call.1} parent=1 // pred_fallthru
      _
    // Predicated region
    $region18: #{tpu_custom_call.1} parent=1 // pred_check
      _
    $region19: #{tpu_custom_call.1} parent=1 // pred_check_branch
      %27 = sbr.rel (0) target = $region21
    $region20: #{tpu_custom_call.1} parent=1 // pred_region
      _
    $region21: #{tpu_custom_call.1} parent=1 // pred_fallthru
      _
    // Predicated region
    $region22: #{tpu_custom_call.1} parent=1 // pred_check
      _
    $region23: #{tpu_custom_call.1} parent=1 // pred_check_branch
      %29 = sbr.rel (0) target = $region25
    $region24: #{tpu_custom_call.1} parent=1 // pred_region
      _
    $region25: #{tpu_custom_call.1} parent=1 // pred_fallthru
      _
    // Predicated region
    $region26: #{tpu_custom_call.1} parent=1 // pred_check
      _
    $region27: #{tpu_custom_call.1} parent=1 // pred_check_branch
      %31 = sbr.rel (0) target = $region29
    $region28: #{tpu_custom_call.1} parent=1 // pred_region
      _
    $region29: #{tpu_custom_call.1} parent=1 // pred_fallthru
      _
    // Predicated region
    $region30: #{tpu_custom_call.1} parent=1 // pred_check
      _
    $region31: #{tpu_custom_call.1} parent=1 // pred_check_branch
      %33 = sbr.rel (0) target = $region33
    $region32: #{tpu_custom_call.1} parent=1 // pred_region
      _
    $region33: #{tpu_custom_call.1} parent=1 // pred_fallthru
      _
    // Predicated region
    $region34: #{tpu_custom_call.1} parent=1 // pred_check
      _
    $region35: #{tpu_custom_call.1} parent=1 // pred_check_branch
      %35 = sbr.rel (0) target = $region37
    $region36: #{tpu_custom_call.1} parent=1 // pred_region
      _
    $region37: #{tpu_custom_call.1} parent=1 // pred_fallthru
      _
    // Predicated region
    $region38: #{tpu_custom_call.1} parent=1 // pred_check
      _
    $region39: #{tpu_custom_call.1} parent=1 // pred_check_branch
      %37 = sbr.rel (0) target = $region41
    $region40: #{tpu_custom_call.1} parent=1 // pred_region
      _
    $region41: #{tpu_custom_call.1} parent=1 // pred_fallthru
      _
    // Predicated region
    $region42: #{tpu_custom_call.1} parent=1 // pred_check
      _
    $region43: #{tpu_custom_call.1} parent=1 // pred_check_branch
      %39 = sbr.rel (0) target = $region45
    $region44: #{tpu_custom_call.1} parent=1 // pred_region
      _
    $region45: #{tpu_custom_call.1} parent=1 // pred_fallthru
      _
    // Predicated region
    $region46: #{tpu_custom_call.1} parent=1 // pred_check
      _
    $region47: #{tpu_custom_call.1} parent=1 // pred_check_branch
      %41 = sbr.rel (0) target = $region49
    $region48: #{tpu_custom_call.1} parent=1 // pred_region
      _
    $region49: #{tpu_custom_call.1} parent=1 // pred_fallthru
      _
    %v43 = vld [vmem:[%s0] sm:$0xff]
    %v44 = vpack.c.bf16 %v43, %v43
    %v45 = vld [vmem:[%s2] sm:$0xf]
    %v46 = vld [vmem:[%s2 + $0x4] sm:$0x7]
    %v47 = vld [vmem:[%s3] sm:$0x1]
    %v49 = vperm.slane %v47, 0
    %v53 = vunpack.c.l.b16 %v45
    %v54 = vunpack.c.l.b16 %v46
    %v55 = vpack.c.b16 %v54, %v53
    %vm56 = vcmask 105472
    %v58 = vsel %vm56, %v44, 0
    %vm60 = vcmask 1045504
    %vm61 = vcmask 1046528
    %v62 = vsel %vm60, 4294967295, 65535
    %v63 = vsel %vm61, %v62, 0
    %v65 = vand.u32 %v55, %v63
    %67 = vmatpush.bf16.msra.mxu0 0
    %68 = vmatpush.bf16.msra.mxu0 0
    %69 = vmatpush.bf16.msra.mxu0 0
    %70 = vmatpush.bf16.msra.mxu0 0
    %71 = vmatpush.bf16.msra.mxu0 0
    %72 = vmatpush.bf16.msra.mxu0 0
    %73 = vmatpush.bf16.msra.mxu0 0
    %74 = vmatpush.bf16.msra.mxu0 %v65
    %75 = vmatmul.bf16.gmra.mxu0 %v58
    %v76 = vpop.f32.mrf.mxu0
    %v77 = vadd.f32 %v49, %v76
    %v78 = vpop.f32.mrf.mxu0
    %79 = vdwg.mxu0
    %v80 = vpack.c.bf16 %v77, %v77
    %v81 = vunpack.c.l.bf16 %v80
    %v82 = vmul.f32 %v81, 0.5
    %v83 = vpack.c.bf16 %v82, %v82
    %v84 = vunpack.c.l.bf16 %v83
    %v85 = vtanh.pop %v84
    %v86 = vpack.c.bf16 %v85, %v85
    %v87 = vunpack.c.l.bf16 %v86
    %v88 = vadd.f32 %v87, 1.0
    %v89 = vpack.c.bf16 %v88, %v88
    %v90 = vunpack.c.l.bf16 %v89
    %v91 = vmul.f32 %v90, 0.5
    %v92 = vpack.c.bf16 %v91, %v91
    %v93 = vunpack.c.l.bf16 %v92
    %v94 = vmul.f32 %v81, %v93
    %v95 = vpack.c.bf16 %v94, %v94
    %v96 = vld [vmem:[%s4] sm:$0xf]
    %v97 = vld [vmem:[%s4 + $0x4] sm:$0xf]
    %v98 = vld [vmem:[%s4 + $0x8] sm:$0xf]
    %v99 = vld [vmem:[%s4 + $0xc] sm:$0xf]
    %v100 = vld [vmem:[%s4 + $0x10] sm:$0xf]
    %v101 = vld [vmem:[%s4 + $0x14] sm:$0xf]
    %v102 = vld [vmem:[%s4 + $0x18] sm:$0xf]
    %v103 = vld [vmem:[%s4 + $0x1c] sm:$0xf]
    %v104 = vld [vmem:[%s4 + $0x20] sm:$0xf]
    %v105 = vld [vmem:[%s4 + $0x24] sm:$0xf]
    %v106 = vld [vmem:[%s4 + $0x28] sm:$0xf]
    %v107 = vld [vmem:[%s4 + $0x2c] sm:$0xf]
    %v108 = vld [vmem:[%s4 + $0x30] sm:$0xf]
    %v109 = vld [vmem:[%s4 + $0x34] sm:$0xf]
    %v110 = vld [vmem:[%s4 + $0x38] sm:$0xf]
    %v111 = vld [vmem:[%s4 + $0x3c] sm:$0xf]
    %v112 = vld [vmem:[%s5] sm:$0x1]
    %v114 = vperm.slane %v112, 0
    %v132 = vunpack.c.l.b16 %v96
    %v133 = vunpack.c.l.b16 %v97
    %v134 = vunpack.c.l.b16 %v98
    %v135 = vunpack.c.l.b16 %v99
    %v136 = vunpack.c.l.b16 %v100
    %v137 = vunpack.c.l.b16 %v101
    %v138 = vunpack.c.l.b16 %v102
    %v139 = vunpack.c.l.b16 %v103
    %v140 = vunpack.c.l.b16 %v104
    %v141 = vunpack.c.l.b16 %v105
    %v142 = vunpack.c.l.b16 %v106
    %v143 = vunpack.c.l.b16 %v107
    %v144 = vunpack.c.l.b16 %v108
    %v145 = vunpack.c.l.b16 %v109
    %v146 = vunpack.c.l.b16 %v110
    %v147 = vunpack.c.l.b16 %v111
    %v148 = vpack.c.b16 %v133, %v132
    %v149 = vpack.c.b16 %v135, %v134
    %v150 = vpack.c.b16 %v137, %v136
    %v151 = vpack.c.b16 %v139, %v138
    %v152 = vpack.c.b16 %v141, %v140
    %v153 = vpack.c.b16 %v143, %v142
    %v154 = vpack.c.b16 %v145, %v144
    %v155 = vpack.c.b16 %v147, %v146
    %164 = vmatpush.bf16.msra.mxu0 %v155
    %165 = vmatpush.bf16.msra.mxu0 %v154
    %166 = vmatpush.bf16.msra.mxu0 %v153
    %167 = vmatpush.bf16.msra.mxu0 %v152
    %168 = vmatpush.bf16.msra.mxu0 %v151
    %169 = vmatpush.bf16.msra.mxu0 %v150
    %170 = vmatpush.bf16.msra.mxu0 %v149
    %171 = vmatpush.bf16.msra.mxu0 %v148
    %172 = vmatmul.bf16.gmra.mxu0 %v95
    %v173 = vpop.f32.mrf.mxu0
    %v174 = vadd.f32 %v114, %v173
    %v175 = vpop.f32.mrf.mxu0
    %176 = vdwg.mxu0
    %v177 = vpack.c.bf16 %v174, %v174
    %v178 = vunpack.c.l.bf16 %v177
    %v179 = vmul.f32 %v178, 0.5
    %v180 = vpack.c.bf16 %v179, %v179
    %v181 = vunpack.c.l.bf16 %v180
    %v182 = vtanh.pop %v181
    %v183 = vpack.c.bf16 %v182, %v182
    %v184 = vunpack.c.l.bf16 %v183
    %v185 = vadd.f32 %v184, 1.0
    %v186 = vpack.c.bf16 %v185, %v185
    %v187 = vunpack.c.l.bf16 %v186
    %v188 = vmul.f32 %v187, 0.5
    %v189 = vpack.c.bf16 %v188, %v188
    %v190 = vunpack.c.l.bf16 %v189
    %v191 = vmul.f32 %v178, %v190
    %v192 = vpack.c.bf16 %v191, %v191
    %v193 = vld [vmem:[%s6] sm:$0xf]
    %v194 = vld [vmem:[%s6 + $0x4] sm:$0xf]
    %v195 = vld [vmem:[%s6 + $0x8] sm:$0xf]
    %v196 = vld [vmem:[%s6 + $0xc] sm:$0xf]
    %v197 = vld [vmem:[%s6 + $0x10] sm:$0xf]
    %v198 = vld [vmem:[%s6 + $0x14] sm:$0xf]
    %v199 = vld [vmem:[%s6 + $0x18] sm:$0xf]
    %v200 = vld [vmem:[%s6 + $0x1c] sm:$0xf]
    %v201 = vld [vmem:[%s7] sm:$0x1]
    %v203 = vperm.slane %v201, 0
    %v213 = vunpack.c.l.b16 %v193
    %v214 = vunpack.c.l.b16 %v194
    %v215 = vunpack.c.l.b16 %v195
    %v216 = vunpack.c.l.b16 %v196
    %v217 = vunpack.c.l.b16 %v197
    %v218 = vunpack.c.l.b16 %v198
    %v219 = vunpack.c.l.b16 %v199
    %v220 = vunpack.c.l.b16 %v200
    %v221 = vpack.c.b16 %v214, %v213
    %v222 = vpack.c.b16 %v216, %v215
    %v223 = vpack.c.b16 %v218, %v217
    %v224 = vpack.c.b16 %v220, %v219
    %vm229 = vcmask 523264
    %v231 = vsel %vm229, %v192, 0
    %233 = vmatpush.bf16.msra.mxu0 0
    %234 = vmatpush.bf16.msra.mxu0 0
    %235 = vmatpush.bf16.msra.mxu0 0
    %236 = vmatpush.bf16.msra.mxu0 0
    %237 = vmatpush.bf16.msra.mxu0 %v224
    %238 = vmatpush.bf16.msra.mxu0 %v223
    %239 = vmatpush.bf16.msra.mxu0 %v222
    %240 = vmatpush.bf16.msra.mxu0 %v221
    %241 = vmatmul.bf16.gmra.mxu0 %v231
    %v242 = vpop.f32.mrf.mxu0
    %v243 = vadd.f32 %v203, %v242
    %v244 = vpop.f32.mrf.mxu0
    %245 = vdwg.mxu0
    %v246 = vpack.c.bf16 %v243, %v243
    %v247 = vunpack.c.l.bf16 %v246
    %v248 = vmul.f32 %v247, 0.5
    %v249 = vpack.c.bf16 %v248, %v248
    %v250 = vunpack.c.l.bf16 %v249
    %v251 = vtanh.pop %v250
    %v252 = vpack.c.bf16 %v251, %v251
    %v253 = vunpack.c.l.bf16 %v252
    %v254 = vadd.f32 %v253, 1.0
    %v255 = vpack.c.bf16 %v254, %v254
    %v256 = vunpack.c.l.bf16 %v255
    %v257 = vmul.f32 %v256, 0.5
    %v258 = vpack.c.bf16 %v257, %v257
    %v259 = vunpack.c.l.bf16 %v258
    %v260 = vmul.f32 %v247, %v259
    %v261 = vpack.c.bf16 %v260, %v260
    %v262 = vld [vmem:[%s8] sm:$0xf]
    %v263 = vld [vmem:[%s8 + $0x4] sm:$0xf]
    %v264 = vld [vmem:[%s8 + $0x8] sm:$0xf]
    %v265 = vld [vmem:[%s8 + $0xc] sm:$0xf]
    %v266 = vld [vmem:[%s9] sm:$0x1]
    %v268 = vperm.slane %v266, 0
    %v274 = vunpack.c.l.b16 %v262
    %v275 = vunpack.c.l.b16 %v263
    %v276 = vunpack.c.l.b16 %v264
    %v277 = vunpack.c.l.b16 %v265
    %v278 = vpack.c.b16 %v275, %v274
    %v279 = vpack.c.b16 %v277, %v276
    %vm282 = vcmask 261120
    %v284 = vsel %vm282, %v261, 0
    %286 = vmatpush.bf16.msra.mxu0 0
    %287 = vmatpush.bf16.msra.mxu0 0
    %288 = vmatpush.bf16.msra.mxu0 0
    %289 = vmatpush.bf16.msra.mxu0 0
    %290 = vmatpush.bf16.msra.mxu0 0
    %291 = vmatpush.bf16.msra.mxu0 0
    %292 = vmatpush.bf16.msra.mxu0 %v279
    %293 = vmatpush.bf16.msra.mxu0 %v278
    %294 = vmatmul.bf16.gmra.mxu0 %v284
    %v295 = vpop.f32.mrf.mxu0
    %v296 = vadd.f32 %v268, %v295
    %v297 = vpop.f32.mrf.mxu0
    %298 = vdwg.mxu0
    %v299 = vld [vmem:[%s1] sm:$0xff]
    %v300 = vld [vmem:[%s10] sm:$0x7]
    %v301 = vld [vmem:[%s11] sm:$0x1]
    %303 = vset.pattern.permute.xlu0 0
    %304 = vperm.xlu0 %303, %v299
    %v305 = vpop.permute.xlu0 %304
    %v307 = vperm.slane %v300, 0
    %v308 = vmul.f32 %v305, %v307
    %v310 = vperm.slane %v301, 0
    %v312 = vadd.f32 %v310, %v308
    %313 = vset.pattern.permute.xlu0 1
    %314 = vperm.xlu0 %313, %v299
    %v315 = vpop.permute.xlu0 %314
    %v317 = vperm.slane %v300, 1
    %v318 = vmul.f32 %v315, %v317
    %v319 = vadd.f32 %v312, %v318
    %320 = vset.pattern.permute.xlu0 2
    %321 = vperm.xlu0 %320, %v299
    %v322 = vpop.permute.xlu0 %321
    %v324 = vperm.slane %v300, 2
    %v325 = vmul.f32 %v322, %v324
    %v326 = vadd.f32 %v319, %v325
    %v327 = vmul.f32 %v326, 0.5
    %v328 = vtanh.pop %v327
    %v329 = vadd.f32 %v328, 1.0
    %v330 = vmul.f32 %v329, 0.5
    %v331 = vadd.f32 %v330, 1.0
    %v332 = vmul.f32 %v296, %v331
    %vm333 = vcmask 39936
    %334 = vst.msk [vmem:[#allocation2] sm:$0xff] %vm333, %v332
    // Predicated region
    $region50: #{tpu_custom_call.1} parent=1 // pred_check
      _
    $region51: #{tpu_custom_call.1} parent=1 // pred_check_branch
      %336 = sbr.rel (0) target = $region53
    $region52: #{tpu_custom_call.1} parent=1 // pred_region
      %338 = vsyncadd [#allocation3], 0
      %s340 = sshll.u32 [#allocation2], 4
      %s341 = int_to_ptr.vmem [resolvable:$true] %s340
      %s342 = sshll.u32 %s12, 4
      %s343 = int_to_ptr.hbm [resolvable:$true] %s342
      %345 = dma.vmem_to_hbm [thread:$0]  %s341, 128, %s343, [#allocation3]
    $region53: #{tpu_custom_call.1} parent=1 // pred_fallthru
      _
    // Predicated region
    $region54: #{tpu_custom_call.1} parent=1 // pred_check
      _
    $region55: #{tpu_custom_call.1} parent=1 // pred_check_branch
      %347 = sbr.rel (0) target = $region57
    $region56: #{tpu_custom_call.1} parent=1 // pred_region
      %349 = dma.done [#allocation3], 128
    $region57: #{tpu_custom_call.1} parent=1 // pred_fallthru
      _
    %350 = vsyncpa [#allocation3], 1

</llo_original>
